<compile_context>
chip_gen: v7x
topology: tpu7x:2x2x1
jax: 0.10.0
libtpu: 0.0.40
codegen_flags: <defaults>
</compile_context>

<pallas_src>
import functools

import jax
import jax.numpy as jnp
from jax.experimental import pallas as pl
from jax.experimental.pallas import tpu as pltpu

_LANES = 128
_SUBLANES = 8
_CHUNK_ROWS = 256        # strip-mine chunk (multiple of 32 -> aligned for all dtypes)
_PAD_LOGIT = -30.0       # sigmoid(-30) ~ 9e-14: padded elements contribute ~0


def _round_up(x, m):
    return ((x + m - 1) // m) * m


def _tpu_kind():
    try:
        return jax.devices()[0].device_kind.lower()
    except Exception:
        return ""


def _row_tile_cap(kind):
    if "v7" in kind or "7x" in kind:
        return 8192
    if "v6" in kind:
        return 4096
    return 2048           # v5e / unknown: stay under the small scoped-VMEM default


def _multi_tensorcore(kind):
    return any(tag in kind for tag in ("v7", "7x", "v4", "v5p"))


def _sublane_multiple(dtype):
    item = jnp.dtype(dtype).itemsize
    return _SUBLANES * max(1, 4 // item)   # f32 -> 8, bf16 -> 16, int8/bool -> 32


def _mixed_loss_kernel(x_ref, t_ref, part_ref, *, gamma, cs, n_full, cs_rem,
                       binary_targets):
    """Grid = (outer 'parallel', inner 'arbitrary') over (tm, 128) row tiles.

    part_ref is a (3, 8, 128) partial-sum block per outer index, resident across
    the inner axis: [0] focal numerator, [1] sum(sig*t), [2] sum(sig) + sum(t).
    The tile body is strip-mined into `cs`-row chunks to bound live temporaries.
    """

    @pl.when(pl.program_id(1) == 0)
    def _():
        part_ref[...] = jnp.zeros_like(part_ref)

    def accum(r0, nrows):
        x = x_ref[pl.ds(r0, nrows), :].astype(jnp.float32)
        t = t_ref[pl.ds(r0, nrows), :].astype(jnp.float32)

        # ---- single transcendental pass ----
        ax = jnp.abs(x)
        e = jnp.exp(-ax)                      # exp(-|x|)
        log1pe = jnp.log1p(e)

        # Stable BCE-with-logits: max(x,0) - x*t + log1p(exp(-|x|))
        bce = jnp.maximum(x, 0.0) - x * t + log1pe

        # sigmoid(x) via approx reciprocal (EUP slot, nearly free)
        inv = pl.reciprocal(1.0 + e, approx=True)
        sig = jnp.where(x >= 0.0, inv, e * inv)

        # focal weight = exp(gamma * logsigmoid(-x*(2t-1)))
        if gamma == 2.0 and binary_targets:
            # sigmoid(-x*(2t-1)) == sig + t*(1-2*sig) for t in {0,1}; square it.
            sz = sig + t * (1.0 - 2.0 * sig)
            w = sz * sz
        elif binary_targets:
            # |z| == |x| for binary targets -> reuse log1pe, one extra exp only.
            z = -x * (2.0 * t - 1.0)
            logsig = jnp.minimum(z, 0.0) - log1pe
            w = jnp.exp(logsig * gamma)
        else:
            # soft labels: full logsigmoid path.
            z = -x * (2.0 * t - 1.0)
            logsig = jnp.minimum(z, 0.0) - jnp.log1p(jnp.exp(-jnp.abs(z)))
            w = jnp.exp(logsig * gamma)

        focal = w * bce
        inter = sig * t
        denom = sig + t

        # VPU-only accumulation: collapse groups of 8 rows with elementwise adds;
        # the cross-sublane/lane collapse happens in the (tiny) wrapper.
        def red(v):
            return jnp.sum(v.reshape(nrows // _SUBLANES, _SUBLANES, _LANES), axis=0)

        part_ref[0] += red(focal)
        part_ref[1] += red(inter)
        part_ref[2] += red(denom)

    if n_full > 0:
        def body(c, carry):
            accum(pl.multiple_of(c * cs, cs), cs)
            return carry
        jax.lax.fori_loop(0, n_full, body, 0)
    if cs_rem > 0:
        accum(n_full * cs, cs_rem)


def mixed_loss(logits, target, alpha=0.5, gamma=2.0, assume_binary_targets=True):
    """MixedLoss.forward(input, target) -> scalar f32.

    Pass logits/targets in their native dtype (bf16 logits & int8/bool targets
    halve HBM traffic); the kernel casts to f32 internally.
    Set assume_binary_targets=False if targets are soft labels in (0, 1).
    """
    total = int(logits.size)
    assert total == int(target.size), "logits/target size mismatch"

    kind = _tpu_kind()
    cap = _row_tile_cap(kind)
    sub = max(_sublane_multiple(logits.dtype), _sublane_multiple(target.dtype))

    rows = -(-total // _LANES)                       # ceil(total / 128)

    if total == rows * _LANES and rows % sub == 0 and rows <= cap:
        # Zero-copy fast path: one full-extent block, no padding at all.
        tm = rows
        blocks = 1
    else:
        tm = min(cap, _round_up(rows, _CHUNK_ROWS))  # multiple of the chunk size
        blocks = -(-rows // tm)

    needs_pad = blocks * tm * _LANES != total
    n_outer = 1
    # 2-way split only on multi-TC parts, and only if it doesn't introduce a
    # padded tile (and the full-array pad copy) that wasn't already required.
    if _multi_tensorcore(kind) and blocks >= 2 and (blocks % 2 == 0 or needs_pad):
        n_outer = 2
    blocks_padded = _round_up(blocks, n_outer)
    n_inner = blocks_padded // n_outer
    rows_padded = blocks_padded * tm
    total_padded = rows_padded * _LANES

    xf = logits.reshape(-1)
    tf = target.reshape(-1)
    if total_padded != total:
        # Sentinel pad: no in-kernel masking needed (pad elements contribute ~0).
        pad = total_padded - total
        xf = jnp.pad(xf, (0, pad), constant_values=_PAD_LOGIT)
        tf = jnp.pad(tf, (0, pad), constant_values=0)
    x2 = xf.reshape(rows_padded, _LANES)
    t2 = tf.reshape(rows_padded, _LANES)

    n_full, cs_rem = divmod(tm, _CHUNK_ROWS)

    kernel = functools.partial(
        _mixed_loss_kernel, gamma=float(gamma), cs=_CHUNK_ROWS,
        n_full=n_full, cs_rem=cs_rem,
        binary_targets=bool(assume_binary_targets))

    partials = pl.pallas_call(
        kernel,
        out_shape=jax.ShapeDtypeStruct((n_outer, 3, _SUBLANES, _LANES),
                                       jnp.float32),
        grid_spec=pltpu.PrefetchScalarGridSpec(
            num_scalar_prefetch=0,
            grid=(n_outer, n_inner),
            in_specs=[
                pl.BlockSpec((tm, _LANES), lambda o, i: (o * n_inner + i, 0)),
                pl.BlockSpec((tm, _LANES), lambda o, i: (o * n_inner + i, 0)),
            ],
            out_specs=pl.BlockSpec((None, 3, _SUBLANES, _LANES),
                                   lambda o, i: (o, 0, 0, 0)),
        ),
        compiler_params=pltpu.CompilerParams(
            dimension_semantics=("parallel", "arbitrary"),
            vmem_limit_bytes=32 * 1024 * 1024),
    )(x2, t2)

    # Tiny final reduction + scalar math in the wrapper.
    sums = jnp.sum(partials, axis=(0, 2, 3))         # (3,)
    focal_mean = sums[0] / total
    smooth = 1.0
    dice = (2.0 * sums[1] + smooth) / (sums[2] + smooth)
    return alpha * focal_mean - jnp.log(dice)


def _mixed_loss_ref(logits, target, alpha=0.5, gamma=2.0):
    """Pure-JAX reference mirroring the PyTorch module (for verification)."""
    x = logits.astype(jnp.float32)
    t = target.astype(jnp.float32)
    max_val = jnp.maximum(-x, 0.0)
    bce = x - x * t + max_val + jnp.log(jnp.exp(-max_val) + jnp.exp(-x - max_val))
    invprobs = jax.nn.log_sigmoid(-x * (2.0 * t - 1.0))
    focal = jnp.mean(jnp.exp(invprobs * gamma) * bce)
    sig = jax.nn.sigmoid(x)
    smooth = 1.0
    dice = (2.0 * jnp.sum(sig * t) + smooth) / (jnp.sum(sig) + jnp.sum(t) + smooth)
    return alpha * focal - jnp.log(dice)


if __name__ == "__main__":
    key = jax.random.PRNGKey(0)
    k1, k2, k3, k4 = jax.random.split(key, 4)

    # Tolerance is loosened vs. the exact path because sigmoid uses the EUP
    # approx reciprocal (~1e-4 relative), per the perf review.
    TOL = dict(atol=5e-3, rtol=5e-3)

    # Lane-aligned NCHW case: zero-copy fast path (single full-extent block).
    x = jax.random.normal(k1, (2, 4, 16, 16), dtype=jnp.float32)
    t = (jax.random.uniform(k2, (2, 4, 16, 16)) > 0.5).astype(jnp.float32)
    loss = jax.block_until_ready(mixed_loss(x, t))
    ref = _mixed_loss_ref(x, t)
    assert jnp.allclose(loss, ref, **TOL), (loss, ref)

    # Ragged case (total % 128 != 0): sentinel-padded, no in-kernel masking.
    xr = jax.random.normal(k3, (3, 3, 7, 5), dtype=jnp.float32)
    tr = (jax.random.uniform(k4, (3, 3, 7, 5)) > 0.5).astype(jnp.float32)
    loss_r = jax.block_until_ready(mixed_loss(xr, tr))
    ref_r = _mixed_loss_ref(xr, tr)
    assert jnp.allclose(loss_r, ref_r, **TOL), (loss_r, ref_r)

    # bf16 logits path (halves HBM read traffic; cast to f32 inside the kernel).
    xb = x.astype(jnp.bfloat16)
    loss_b = jax.block_until_ready(mixed_loss(xb, t))
    ref_b = _mixed_loss_ref(xb, t)
    assert jnp.allclose(loss_b, ref_b, **TOL), (loss_b, ref_b)

    print("KERNEL_OK")
</pallas_src>

<mosaic_0001>
module attributes {stable_mosaic.version = 11 : i64} {
  func.func @_mixed_loss_kernel(%arg0: i32, %arg1: i32, %arg2: memref<16x128xf32, #tpu.memory_space<vmem>>, %arg3: memref<16x128xf32, #tpu.memory_space<vmem>>, %arg4: memref<1x3x8x128xf32, #tpu.memory_space<vmem>>) attributes {dimension_semantics = [#tpu.dimension_semantics<parallel>, #tpu.dimension_semantics<arbitrary>], iteration_bounds = array<i64: 1, 1>, scalar_prefetch = 0 : i64, scratch_operands = 0 : i64, tpu.core_type = #tpu.core_type<tc>, window_params = [{transform_indices = @transform_0, window_bounds = array<i64: 16, 128>}, {transform_indices = @transform_1, window_bounds = array<i64: 16, 128>}, {transform_indices = @transform_2, window_bounds = array<i64: 1, 3, 8, 128>}]} {
    %c0_i32 = arith.constant 0 : i32
    %0 = arith.cmpi eq, %arg1, %c0_i32 : i32
    %1 = arith.extui %0 : i1 to i32
    %c0_i32_0 = arith.constant 0 : i32
    %2 = arith.cmpi ne, %1, %c0_i32_0 : i32
    scf.if %2 {
      %cst_34 = arith.constant 0.000000e+00 : f32
      %56 = vector.broadcast %cst_34 : f32 to vector<3x8x128xf32>
      %c0_35 = arith.constant 0 : index
      %c0_36 = arith.constant 0 : index
      %c0_37 = arith.constant 0 : index
      %c0_38 = arith.constant 0 : index
      %57 = vector.load %arg4[%c0_35, %c0_36, %c0_37, %c0_38] : memref<1x3x8x128xf32, #tpu.memory_space<vmem>>, vector<1x3x8x128xf32>
      %58 = vector.shape_cast %57 : vector<1x3x8x128xf32> to vector<3x8x128xf32>
      %59 = vector.shape_cast %56 : vector<3x8x128xf32> to vector<1x3x8x128xf32>
      tpu.vector_store %arg4[%c0_35, %c0_36, %c0_37, %c0_38], %59 {strides = array<i32>} : memref<1x3x8x128xf32, #tpu.memory_space<vmem>>, vector<1x3x8x128xf32>,
    } else {
    }
    %c0 = arith.constant 0 : index
    %c0_1 = arith.constant 0 : index
    %3 = vector.load %arg2[%c0, %c0_1] : memref<16x128xf32, #tpu.memory_space<vmem>>, vector<16x128xf32>
    %c0_2 = arith.constant 0 : index
    %c0_3 = arith.constant 0 : index
    %4 = vector.load %arg3[%c0_2, %c0_3] : memref<16x128xf32, #tpu.memory_space<vmem>>, vector<16x128xf32>
    %5 = math.absf %3 : vector<16x128xf32>
    %cst = arith.constant 0.000000e+00 : f32
    %6 = vector.broadcast %cst : f32 to vector<16x128xf32>
    %7 = arith.subf %6, %5 : vector<16x128xf32>
    %8 = math.exp %7 : vector<16x128xf32>
    %9 = math.log1p %8 : vector<16x128xf32>
    %cst_4 = arith.constant 0.000000e+00 : f32
    %10 = vector.broadcast %cst_4 : f32 to vector<16x128xf32>
    %11 = arith.maximumf %3, %10 : vector<16x128xf32>
    %12 = arith.mulf %3, %4 : vector<16x128xf32>
    %13 = arith.subf %11, %12 : vector<16x128xf32>
    %14 = arith.addf %13, %9 : vector<16x128xf32>
    %cst_5 = arith.constant 1.000000e+00 : f32
    %15 = vector.broadcast %cst_5 : f32 to vector<16x128xf32>
    %16 = arith.addf %15, %8 : vector<16x128xf32>
    %17 = tpu.reciprocal %16 {approx = true} : vector<16x128xf32> -> vector<16x128xf32>
    %cst_6 = arith.constant 0.000000e+00 : f32
    %18 = vector.broadcast %cst_6 : f32 to vector<16x128xf32>
    %19 = arith.cmpf oge, %3, %18 : vector<16x128xf32>
    %20 = arith.mulf %8, %17 : vector<16x128xf32>
    %21 = arith.select %19, %17, %20 : vector<16x128xi1>, vector<16x128xf32>
    %cst_7 = arith.constant 2.000000e+00 : f32
    %22 = vector.broadcast %cst_7 : f32 to vector<16x128xf32>
    %23 = arith.mulf %22, %21 : vector<16x128xf32>
    %cst_8 = arith.constant 1.000000e+00 : f32
    %24 = vector.broadcast %cst_8 : f32 to vector<16x128xf32>
    %25 = arith.subf %24, %23 : vector<16x128xf32>
    %26 = arith.mulf %4, %25 : vector<16x128xf32>
    %27 = arith.addf %21, %26 : vector<16x128xf32>
    %28 = arith.mulf %27, %27 : vector<16x128xf32>
    %29 = arith.mulf %28, %14 : vector<16x128xf32>
    %30 = arith.mulf %21, %4 : vector<16x128xf32>
    %31 = arith.addf %21, %4 : vector<16x128xf32>
    %c0_9 = arith.constant 0 : index
    %c0_10 = arith.constant 0 : index
    %c0_11 = arith.constant 0 : index
    %c0_12 = arith.constant 0 : index
    %32 = vector.load %arg4[%c0_9, %c0_10, %c0_11, %c0_12] : memref<1x3x8x128xf32, #tpu.memory_space<vmem>>, vector<1x1x8x128xf32>
    %33 = vector.shape_cast %32 : vector<1x1x8x128xf32> to vector<8x128xf32>
    %34 = vector.shape_cast %29 : vector<16x128xf32> to vector<2x8x128xf32>
    %cst_13 = arith.constant dense<0.000000e+00> : vector<8x128xf32>
    %35 = vector.multi_reduction <add>, %34, %cst_13 [0] : vector<2x8x128xf32> to vector<8x128xf32>
    %36 = arith.addf %33, %35 : vector<8x128xf32>
    %c0_14 = arith.constant 0 : index
    %c0_15 = arith.constant 0 : index
    %c0_16 = arith.constant 0 : index
    %c0_17 = arith.constant 0 : index
    %37 = vector.load %arg4[%c0_14, %c0_15, %c0_16, %c0_17] : memref<1x3x8x128xf32, #tpu.memory_space<vmem>>, vector<1x1x8x128xf32>
    %38 = vector.shape_cast %37 : vector<1x1x8x128xf32> to vector<8x128xf32>
    %39 = vector.shape_cast %36 : vector<8x128xf32> to vector<1x1x8x128xf32>
    tpu.vector_store %arg4[%c0_14, %c0_15, %c0_16, %c0_17], %39 {strides = array<i32>} : memref<1x3x8x128xf32, #tpu.memory_space<vmem>>, vector<1x1x8x128xf32>,
    %c0_18 = arith.constant 0 : index
    %c1 = arith.constant 1 : index
    %c0_19 = arith.constant 0 : index
    %c0_20 = arith.constant 0 : index
    %40 = vector.load %arg4[%c0_18, %c1, %c0_19, %c0_20] : memref<1x3x8x128xf32, #tpu.memory_space<vmem>>, vector<1x1x8x128xf32>
    %41 = vector.shape_cast %40 : vector<1x1x8x128xf32> to vector<8x128xf32>
    %42 = vector.shape_cast %30 : vector<16x128xf32> to vector<2x8x128xf32>
    %cst_21 = arith.constant dense<0.000000e+00> : vector<8x128xf32>
    %43 = vector.multi_reduction <add>, %42, %cst_21 [0] : vector<2x8x128xf32> to vector<8x128xf32>
    %44 = arith.addf %41, %43 : vector<8x128xf32>
    %c0_22 = arith.constant 0 : index
    %c1_23 = arith.constant 1 : index
    %c0_24 = arith.constant 0 : index
    %c0_25 = arith.constant 0 : index
    %45 = vector.load %arg4[%c0_22, %c1_23, %c0_24, %c0_25] : memref<1x3x8x128xf32, #tpu.memory_space<vmem>>, vector<1x1x8x128xf32>
    %46 = vector.shape_cast %45 : vector<1x1x8x128xf32> to vector<8x128xf32>
    %47 = vector.shape_cast %44 : vector<8x128xf32> to vector<1x1x8x128xf32>
    tpu.vector_store %arg4[%c0_22, %c1_23, %c0_24, %c0_25], %47 {strides = array<i32>} : memref<1x3x8x128xf32, #tpu.memory_space<vmem>>, vector<1x1x8x128xf32>,
    %c0_26 = arith.constant 0 : index
    %c2 = arith.constant 2 : index
    %c0_27 = arith.constant 0 : index
    %c0_28 = arith.constant 0 : index
    %48 = vector.load %arg4[%c0_26, %c2, %c0_27, %c0_28] : memref<1x3x8x128xf32, #tpu.memory_space<vmem>>, vector<1x1x8x128xf32>
    %49 = vector.shape_cast %48 : vector<1x1x8x128xf32> to vector<8x128xf32>
    %50 = vector.shape_cast %31 : vector<16x128xf32> to vector<2x8x128xf32>
    %cst_29 = arith.constant dense<0.000000e+00> : vector<8x128xf32>
    %51 = vector.multi_reduction <add>, %50, %cst_29 [0] : vector<2x8x128xf32> to vector<8x128xf32>
    %52 = arith.addf %49, %51 : vector<8x128xf32>
    %c0_30 = arith.constant 0 : index
    %c2_31 = arith.constant 2 : index
    %c0_32 = arith.constant 0 : index
    %c0_33 = arith.constant 0 : index
    %53 = vector.load %arg4[%c0_30, %c2_31, %c0_32, %c0_33] : memref<1x3x8x128xf32, #tpu.memory_space<vmem>>, vector<1x1x8x128xf32>
    %54 = vector.shape_cast %53 : vector<1x1x8x128xf32> to vector<8x128xf32>
    %55 = vector.shape_cast %52 : vector<8x128xf32> to vector<1x1x8x128xf32>
    tpu.vector_store %arg4[%c0_30, %c2_31, %c0_32, %c0_33], %55 {strides = array<i32>} : memref<1x3x8x128xf32, #tpu.memory_space<vmem>>, vector<1x1x8x128xf32>,
    return
  }
  func.func @transform_0(%arg0: i32, %arg1: i32) -> (i32, i32) {
    %c1_i32 = arith.constant 1 : i32
    %0 = arith.muli %arg0, %c1_i32 : i32
    %1 = arith.addi %0, %arg1 : i32
    %c0_i32 = arith.constant 0 : i32
    %c0_i32_0 = arith.constant 0 : i32
    return %1, %c0_i32 : i32, i32
  }
  func.func @transform_1(%arg0: i32, %arg1: i32) -> (i32, i32) {
    %c1_i32 = arith.constant 1 : i32
    %0 = arith.muli %arg0, %c1_i32 : i32
    %1 = arith.addi %0, %arg1 : i32
    %c0_i32 = arith.constant 0 : i32
    %c0_i32_0 = arith.constant 0 : i32
    return %1, %c0_i32 : i32, i32
  }
  func.func @transform_2(%arg0: i32, %arg1: i32) -> (i32, i32, i32, i32) {
    %c0_i32 = arith.constant 0 : i32
    %c0_i32_0 = arith.constant 0 : i32
    %c0_i32_1 = arith.constant 0 : i32
    %c0_i32_2 = arith.constant 0 : i32
    return %arg0, %c0_i32, %c0_i32_0, %c0_i32_1 : i32, i32, i32, i32
  }
}

</mosaic_0001>

<llo_original>
// kernel: tpu_custom_call.1
$region0: #{tpu_custom_call.1}
  #allocation0 [shape = 'u32[]', space=smem, size = 0x4, offset = 0x4, fixed_abs, tag = 'smem constant byte address 0x4 - core index']
  #allocation1 [shape = 'u32[144,128]{1,0:T(1,128)}', space=vmem, size = 0x12000, scoped, tag = 'internal scratch']
  %s0 = inlined_call_operand.hbm [shape: f32[16,128], index: 0, kind: input, shape index: {}]
  %s1 = inlined_call_operand.hbm [shape: f32[16,128], index: 1, kind: input, shape index: {}]
  %s2 = inlined_call_operand.hbm [shape: f32[1,3,8,128], index: 2, kind: output, shape index: {}]
  %s3 = sld [smem:[#allocation0]]
  $region30: #{tpu_custom_call.1} parent=0
    _
  %s5 = ssub.s32 1, %s3
  %s6 = scalar_select 0, %s5, %s3
  $region1: #{tpu_custom_call.1} parent=0
    #allocation2 [shape = 'u8[8192]{0}', space=vmem, size = 0x2000, scoped, tag = 'input window, operand 0, single buffered']
    #allocation3 [shape = 's32[1]{0}', space=sflag, size = 0x4, scoped, tag = 'scoped memory for tpu_custom_call.1']
    #allocation4 [shape = 's32[1]{0}', space=sflag, size = 0x4, scoped, tag = 'scoped memory for tpu_custom_call.1']
    #allocation5 [shape = 'u8[8192]{0}', space=vmem, size = 0x2000, scoped, tag = 'input window, operand 1, single buffered']
    #allocation6 [shape = 's32[1]{0}', space=sflag, size = 0x4, scoped, tag = 'scoped memory for tpu_custom_call.1']
    #allocation7 [shape = 'u8[12288]{0}', space=vmem, size = 0x3000, scoped, tag = 'output window, operand 0, single buffered']
    %7 = vsyncpa [#allocation3], 0
    %8 = vsyncpa [#allocation6], 0
    %9 = vsyncpa [#allocation4], 0
    // Predicated region
    $region2: #{tpu_custom_call.1} parent=1 // pred_check
      _
    $region3: #{tpu_custom_call.1} parent=1 // pred_check_branch
      %11 = sbr.rel (0) target = $region5
    $region4: #{tpu_custom_call.1} parent=1 // pred_region
      %s12 = sadd.s32 0, 0
      %s13 = smul.u32 2, %s12
      %s15 = ssub.s32 256, 256
      %16 = vsyncadd [#allocation3], %s15
      %s17 = smul.addr %s13, 128
      %s18 = scalar_lea.hbm %s0, %s17
      %s19 = sshll.u32 [#allocation2], 4
      %s20 = int_to_ptr.vmem [resolvable:$true] %s19
      %25 = dma.hbm_to_vmem [thread:$0]  %s18, 256, %s20, [#allocation3], 128, 128, 8
    $region5: #{tpu_custom_call.1} parent=1 // pred_fallthru
      _
    // Predicated region
    $region6: #{tpu_custom_call.1} parent=1 // pred_check
      _
    $region7: #{tpu_custom_call.1} parent=1 // pred_check_branch
      %27 = sbr.rel (0) target = $region9
    $region8: #{tpu_custom_call.1} parent=1 // pred_region
      %s28 = sadd.s32 0, 0
      %s29 = smul.u32 2, %s28
      %s31 = ssub.s32 256, 256
      %32 = vsyncadd [#allocation6], %s31
      %s33 = smul.addr %s29, 128
      %s34 = scalar_lea.hbm %s1, %s33
      %s35 = sshll.u32 [#allocation5], 4
      %s36 = int_to_ptr.vmem [resolvable:$true] %s35
      %41 = dma.hbm_to_vmem [thread:$0]  %s34, 256, %s36, [#allocation6], 128, 128, 8
    $region9: #{tpu_custom_call.1} parent=1 // pred_fallthru
      _
    // Predicated region
    $region10: #{tpu_custom_call.1} parent=1 // pred_check
      _
    $region11: #{tpu_custom_call.1} parent=1 // pred_check_branch
      %43 = sbr.rel (0) target = $region13
    $region12: #{tpu_custom_call.1} parent=1 // pred_region
      %44 = dma.done [#allocation3], 256
    $region13: #{tpu_custom_call.1} parent=1 // pred_fallthru
      _
    // Predicated region
    $region14: #{tpu_custom_call.1} parent=1 // pred_check
      _
    $region15: #{tpu_custom_call.1} parent=1 // pred_check_branch
      %46 = sbr.rel (0) target = $region17
    $region16: #{tpu_custom_call.1} parent=1 // pred_region
      %47 = dma.done [#allocation6], 256
    $region17: #{tpu_custom_call.1} parent=1 // pred_fallthru
      _
    %s48 = sadd.s32 0, 0
    %s49 = smul.u32 2, %s48
    %s50 = sadd.s32 0, 0
    %s51 = smul.u32 2, %s50
    %p52 = scmp.eq.s32.totalorder 0, 0
    // Predicated region
    $region18: #{tpu_custom_call.1} parent=1 // pred_check
      %p53 = pneg %p52
    $region19: #{tpu_custom_call.1} parent=1 // pred_check_branch
      %55 = sbr.rel (%p53) target = $region21
    $region20: #{tpu_custom_call.1} parent=1 // pred_region
      %56 = vst [vmem:[#allocation7] sm:$0xff] 0.0
      %57 = vst [vmem:[#allocation7 + $0x8] sm:$0xff] 0.0
      %58 = vst [vmem:[#allocation7 + $0x10] sm:$0xff] 0.0
    $region21: #{tpu_custom_call.1} parent=1 // pred_fallthru
      _
    %v59 = vld [vmem:[#allocation2] sm:$0xff]
    %v60 = vld [vmem:[#allocation2 + $0x8] sm:$0xff]
    %v61 = vld [vmem:[#allocation5] sm:$0xff]
    %v62 = vld [vmem:[#allocation5 + $0x8] sm:$0xff]
    %v63 = vand.u32 2147483647, %v59
    %v64 = vand.u32 2147483647, %v60
    %v65 = vsub.f32 0.0, %v63
    %v66 = vsub.f32 0.0, %v64
    %v67 = vmul.f32 %v65, 1.442695
    %v68 = vpow.pop %v67
    %v69 = vmul.f32 %v66, 1.442695
    %v70 = vpow.pop %v69
    %v71 = vadd.f32 %v68, 1.0
    %v72 = vlog2.pop %v71
    %v73 = vmul.f32 %v72, 0.6931472
    %v74 = vmul.f32 -0.5, %v68
    %v75 = vadd.f32 %v74, 1.0
    %v76 = vmul.f32 %v75, %v68
    %v77 = vand.u32 2147483647, %v68
    %vm78 = vcmp.lt.f32.partialorder %v77, 0.0004427343
    %v79 = vsel %vm78, %v76, %v73
    %v80 = vadd.f32 %v70, 1.0
    %v81 = vlog2.pop %v80
    %v82 = vmul.f32 %v81, 0.6931472
    %v83 = vmul.f32 -0.5, %v70
    %v84 = vadd.f32 %v83, 1.0
    %v85 = vmul.f32 %v84, %v70
    %v86 = vand.u32 2147483647, %v70
    %vm87 = vcmp.lt.f32.partialorder %v86, 0.0004427343
    %v88 = vsel %vm87, %v85, %v82
    %v89 = vmax.f32 %v59, 0.0
    %v90 = vmax.f32 %v60, 0.0
    %v91 = vmul.f32 %v59, %v61
    %v92 = vmul.f32 %v60, %v62
    %v93 = vsub.f32 %v89, %v91
    %v94 = vsub.f32 %v90, %v92
    %v95 = vadd.f32 %v93, %v79
    %v96 = vadd.f32 %v94, %v88
    %v97 = vadd.f32 %v68, 1.0
    %v98 = vadd.f32 %v70, 1.0
    %v99 = vrcp.pop %v97
    %v100 = vrcp.pop %v98
    %vm101 = vcmp.ge.f32.partialorder %v59, 0.0
    %vm102 = vcmp.ge.f32.partialorder %v60, 0.0
    %v103 = vmul.f32 %v68, %v99
    %v104 = vmul.f32 %v70, %v100
    %v105 = vsel %vm101, %v99, %v103
    %v106 = vsel %vm102, %v100, %v104
    %v107 = vmul.f32 %v105, 2.0
    %v108 = vmul.f32 %v106, 2.0
    %v109 = vsub.f32 1.0, %v107
    %v110 = vsub.f32 1.0, %v108
    %v111 = vmul.f32 %v61, %v109
    %v112 = vmul.f32 %v62, %v110
    %v113 = vadd.f32 %v105, %v111
    %v114 = vadd.f32 %v106, %v112
    %v115 = vmul.f32 %v113, %v113
    %v116 = vmul.f32 %v114, %v114
    %v117 = vmul.f32 %v115, %v95
    %v118 = vmul.f32 %v116, %v96
    %v119 = vmul.f32 %v105, %v61
    %v120 = vmul.f32 %v106, %v62
    %v121 = vadd.f32 %v105, %v61
    %v122 = vadd.f32 %v106, %v62
    %v123 = vld [vmem:[#allocation7] sm:$0xff]
    %v124 = vadd.f32 %v117, %v118
    %v125 = vadd.f32 %v123, %v124
    %126 = vst [vmem:[#allocation7] sm:$0xff] %v125
    %s127 = scalar_lea.vmem [#allocation7], 8
    %v128 = vld [vmem:[%s127] sm:$0xff]
    %v129 = vadd.f32 %v119, %v120
    %v130 = vadd.f32 %v128, %v129
    %131 = vst [vmem:[%s127] sm:$0xff] %v130
    %s132 = scalar_lea.vmem [#allocation7], 16
    %v133 = vld [vmem:[%s132] sm:$0xff]
    %v134 = vadd.f32 %v121, %v122
    %v135 = vadd.f32 %v133, %v134
    %136 = vst [vmem:[%s132] sm:$0xff] %v135
    // Predicated region
    $region22: #{tpu_custom_call.1} parent=1 // pred_check
      _
    $region23: #{tpu_custom_call.1} parent=1 // pred_check_branch
      %138 = sbr.rel (0) target = $region25
    $region24: #{tpu_custom_call.1} parent=1 // pred_region
      %s140 = ssub.s32 384, 384
      %141 = vsyncadd [#allocation4], %s140
      %s142 = sshll.u32 [#allocation7], 4
      %s143 = int_to_ptr.vmem [resolvable:$true] %s142
      %148 = dma.vmem_to_hbm [thread:$0]  %s143, 384, %s2, [#allocation4], 128, 128, 8
    $region25: #{tpu_custom_call.1} parent=1 // pred_fallthru
      _
    // Predicated region
    $region26: #{tpu_custom_call.1} parent=1 // pred_check
      _
    $region27: #{tpu_custom_call.1} parent=1 // pred_check_branch
      %150 = sbr.rel (0) target = $region29
    $region28: #{tpu_custom_call.1} parent=1 // pred_region
      %151 = dma.done [#allocation4], 384
    $region29: #{tpu_custom_call.1} parent=1 // pred_fallthru
      _
    %152 = vsyncpa [#allocation3], 1
    %153 = vsyncpa [#allocation6], 1
    %154 = vsyncpa [#allocation4], 1

</llo_original>
